<compile_context>
chip_gen: v7x
topology: tpu7x:2x2x1
jax: 0.10.0
libtpu: 0.0.40
codegen_flags: <defaults>
</compile_context>

<pallas_src>
import jax
import jax.numpy as jnp
from jax.experimental import pallas as pl
from jax.experimental.pallas import tpu as pltpu


def attention_kernel(x_ref, wt_ref, b_ref, o_ref):
    # x_ref : (TB, S, H)  TB batch elements of lstm_output
    # wt_ref: (H, H)      pre-transposed nn.Linear weight (W^T), y = x @ wt
    # b_ref : (1, H)      nn.Linear bias
    # o_ref : (TB, H)     context vectors for this batch tile
    TB, S, H = x_ref.shape

    x = x_ref[...]                       # keep input dtype (bf16 feeds MXU natively)
    wt = wt_ref[...]
    b = b_ref[...].astype(jnp.float32)   # (1, H)

    # Fused Linear over all TB*S rows (leading-dim collapse is layout-free).
    x2 = x.reshape(TB * S, H)
    y = jnp.dot(x2, wt, preferred_element_type=jnp.float32) + b     # (TB*S, H) f32
    energy = jnp.tanh(y).reshape(TB, S, H)                          # (TB, S, H) f32

    # softmax over seq fused with the weighted sum.  energy is in [-1, 1]
    # (tanh output), so exp never overflows and the max-subtraction of the
    # numerically-stable softmax is a mathematical no-op -> skip it.
    e = jnp.exp(energy)                                             # (TB, S, H)
    num = jnp.sum(e * x.astype(jnp.float32), axis=1)                # (TB, H)
    den = jnp.sum(e, axis=1)                                        # (TB, H)

    # EUP approx reciprocal (free bundle slot) + one Newton step on the small
    # (TB, H) tensor -> ~full f32 accuracy.
    r = pl.reciprocal(den, approx=True)
    r = r * (2.0 - den * r)
    ctx = num * r

    o_ref[...] = ctx.astype(o_ref.dtype)


def attention_forward(lstm_output, weight, bias, *, tb=None):
    """lstm_output: [B, S, H], weight: [H, H] (PyTorch [out,in]), bias: [H] -> [B, H]."""
    B, S, H = lstm_output.shape
    itemsize = jnp.dtype(lstm_output.dtype).itemsize

    # Auto-size the batch tile: target a ~2 MiB x-tile (double-buffered by the
    # BlockSpec pipeline -> ~4 MiB), multiple of 8 sublanes, capped at 256.
    if tb is None:
        target_bytes = 2 * 1024 * 1024
        tb = max(8, min(256, target_bytes // max(1, S * H * itemsize)))
        tb = max(8, (tb // 8) * 8)

    if B <= tb:
        # Single grid step over the whole batch; block == full dim so no
        # (8,128) divisibility constraint and no padding / wasted compute.
        tb = B
        b_pad = B
        x = lstm_output
    else:
        # Pad batch to a multiple of the tile (zero rows are harmless: softmax
        # of tanh(bias) is finite and sum(scores * 0) == 0); slice afterwards.
        b_pad = pl.cdiv(B, tb) * tb
        if b_pad != B:
            x = jnp.concatenate(
                [lstm_output,
                 jnp.zeros((b_pad - B, S, H), lstm_output.dtype)], axis=0)
        else:
            x = lstm_output

    wt = weight.T                       # hoist the transpose out of the kernel
    bias2d = bias.reshape(1, H)

    cost = pl.CostEstimate(
        flops=2 * b_pad * S * H * H,
        transcendentals=2 * b_pad * S * H,          # tanh + exp
        bytes_accessed=(b_pad * S * H + H * H + H + b_pad * H) * itemsize,
    )

    out = pl.pallas_call(
        attention_kernel,
        out_shape=jax.ShapeDtypeStruct((b_pad, H), lstm_output.dtype),
        grid_spec=pltpu.PrefetchScalarGridSpec(
            num_scalar_prefetch=0,
            grid=(b_pad // tb,),
            in_specs=[
                pl.BlockSpec((tb, S, H), lambda i: (i, 0, 0)),   # x tile
                pl.BlockSpec((H, H), lambda i: (0, 0)),          # W^T (resident)
                pl.BlockSpec((1, H), lambda i: (0, 0)),          # bias (resident)
            ],
            out_specs=pl.BlockSpec((tb, H), lambda i: (i, 0)),   # lane-dense slab
        ),
        compiler_params=pltpu.CompilerParams(
            dimension_semantics=("parallel",),       # megacore sharding
        ),
        cost_estimate=cost,
    )(x, wt, bias2d)

    return out[:B]


def attention_reference(lstm_output, weight, bias):
    energy = jnp.tanh(jnp.einsum("bsh,oh->bso", lstm_output, weight) + bias)
    scores = jax.nn.softmax(energy, axis=1)
    return jnp.sum(scores * lstm_output, axis=1)


if __name__ == "__main__":
    B, S, H = 2, 8, 32

    key = jax.random.PRNGKey(0)
    kx, kw, kb = jax.random.split(key, 3)

    # Deterministic "synthetic checkpoint": uniform init like nn.Linear default.
    bound = 1.0 / (H ** 0.5)
    lstm_output = jax.random.normal(kx, (B, S, H), dtype=jnp.float32)
    weight = jax.random.uniform(kw, (H, H), minval=-bound, maxval=bound,
                                dtype=jnp.float32)
    bias = jax.random.uniform(kb, (H,), minval=-bound, maxval=bound,
                              dtype=jnp.float32)

    out = attention_forward(lstm_output, weight, bias)
    out = jax.block_until_ready(out)

    ref = attention_reference(lstm_output, weight, bias)
    assert out.shape == (B, H)
    # Newton-refined reciprocal -> essentially full f32 accuracy.
    assert jnp.allclose(out, ref, atol=1e-4, rtol=1e-4), "mismatch vs reference"

    print("KERNEL_OK")
</pallas_src>

<mosaic_0001>
module attributes {stable_mosaic.version = 11 : i64} {
  func.func @attention_kernel(%arg0: i32, %arg1: memref<2x8x32xf32, #tpu.memory_space<vmem>>, %arg2: memref<32x32xf32, #tpu.memory_space<vmem>>, %arg3: memref<1x32xf32, #tpu.memory_space<vmem>>, %arg4: memref<2x32xf32, #tpu.memory_space<vmem>>) attributes {dimension_semantics = [#tpu.dimension_semantics<parallel>], iteration_bounds = array<i64: 1>, scalar_prefetch = 0 : i64, scratch_operands = 0 : i64, tpu.core_type = #tpu.core_type<tc>, window_params = [{transform_indices = @transform_0, window_bounds = array<i64: 2, 8, 32>}, {pipeline_mode = #tpu.pipeline_mode<synchronous>, transform_indices = @transform_1, window_bounds = array<i64: 32, 32>}, {pipeline_mode = #tpu.pipeline_mode<synchronous>, transform_indices = @transform_2, window_bounds = array<i64: 1, 32>}, {transform_indices = @transform_3, window_bounds = array<i64: 2, 32>}]} {
    %c0 = arith.constant 0 : index
    %c0_0 = arith.constant 0 : index
    %c0_1 = arith.constant 0 : index
    %0 = vector.load %arg1[%c0, %c0_0, %c0_1] : memref<2x8x32xf32, #tpu.memory_space<vmem>>, vector<2x8x32xf32>
    %c0_2 = arith.constant 0 : index
    %c0_3 = arith.constant 0 : index
    %1 = vector.load %arg2[%c0_2, %c0_3] : memref<32x32xf32, #tpu.memory_space<vmem>>, vector<32x32xf32>
    %c0_4 = arith.constant 0 : index
    %c0_5 = arith.constant 0 : index
    %2 = vector.load %arg3[%c0_4, %c0_5] : memref<1x32xf32, #tpu.memory_space<vmem>>, vector<1x32xf32>
    %3 = vector.shape_cast %0 : vector<2x8x32xf32> to vector<16x32xf32>
    %cst = arith.constant dense<0.000000e+00> : vector<16x32xf32>
    %4 = tpu.matmul %3, %1, %cst {dimension_numbers = #tpu.dot_dimension_numbers<[1], [0], [0], [1], [0, 0, 1, 1], [], []>} : vector<16x32xf32>, vector<32x32xf32>, vector<16x32xf32> -> vector<16x32xf32>
    %5 = vector.broadcast %2 : vector<1x32xf32> to vector<16x32xf32>
    %6 = arith.addf %4, %5 : vector<16x32xf32>
    %7 = math.tanh %6 : vector<16x32xf32>
    %8 = vector.shape_cast %7 : vector<16x32xf32> to vector<2x8x32xf32>
    %9 = math.exp %8 : vector<2x8x32xf32>
    %10 = arith.mulf %9, %0 : vector<2x8x32xf32>
    %cst_6 = arith.constant dense<0.000000e+00> : vector<2x32xf32>
    %11 = vector.multi_reduction <add>, %10, %cst_6 [1] : vector<2x8x32xf32> to vector<2x32xf32>
    %cst_7 = arith.constant dense<0.000000e+00> : vector<2x32xf32>
    %12 = vector.multi_reduction <add>, %9, %cst_7 [1] : vector<2x8x32xf32> to vector<2x32xf32>
    %13 = tpu.reciprocal %12 {approx = true} : vector<2x32xf32> -> vector<2x32xf32>
    %14 = arith.mulf %12, %13 : vector<2x32xf32>
    %cst_8 = arith.constant 2.000000e+00 : f32
    %15 = vector.broadcast %cst_8 : f32 to vector<2x32xf32>
    %16 = arith.subf %15, %14 : vector<2x32xf32>
    %17 = arith.mulf %13, %16 : vector<2x32xf32>
    %18 = arith.mulf %11, %17 : vector<2x32xf32>
    %c0_9 = arith.constant 0 : index
    %c0_10 = arith.constant 0 : index
    %19 = vector.load %arg4[%c0_9, %c0_10] : memref<2x32xf32, #tpu.memory_space<vmem>>, vector<2x32xf32>
    tpu.vector_store %arg4[%c0_9, %c0_10], %18 {strides = array<i32>} : memref<2x32xf32, #tpu.memory_space<vmem>>, vector<2x32xf32>,
    return
  }
  func.func @transform_0(%arg0: i32) -> (i32, i32, i32) {
    %c0_i32 = arith.constant 0 : i32
    %c0_i32_0 = arith.constant 0 : i32
    %c0_i32_1 = arith.constant 0 : i32
    return %arg0, %c0_i32, %c0_i32_0 : i32, i32, i32
  }
  func.func @transform_1(%arg0: i32) -> (i32, i32) {
    %c0_i32 = arith.constant 0 : i32
    %c0_i32_0 = arith.constant 0 : i32
    %c0_i32_1 = arith.constant 0 : i32
    return %c0_i32, %c0_i32_0 : i32, i32
  }
  func.func @transform_2(%arg0: i32) -> (i32, i32) {
    %c0_i32 = arith.constant 0 : i32
    %c0_i32_0 = arith.constant 0 : i32
    %c0_i32_1 = arith.constant 0 : i32
    return %c0_i32, %c0_i32_0 : i32, i32
  }
  func.func @transform_3(%arg0: i32) -> (i32, i32) {
    %c0_i32 = arith.constant 0 : i32
    %c0_i32_0 = arith.constant 0 : i32
    return %arg0, %c0_i32 : i32, i32
  }
}

</mosaic_0001>

<llo_original>
// kernel: tpu_custom_call.1
$region0: #{tpu_custom_call.1}
  #allocation0 [shape = 'u32[]', space=smem, size = 0x4, offset = 0x4, fixed_abs, tag = 'smem constant byte address 0x4 - core index']
  #allocation1 [shape = 'u32[144,128]{1,0:T(1,128)}', space=vmem, size = 0x12000, scoped, tag = 'internal scratch']
  %s0 = inlined_call_operand.hbm [shape: f32[2,8,32], index: 0, kind: input, shape index: {}]
  %s1 = inlined_call_operand.hbm [shape: f32[32,32], index: 1, kind: input, shape index: {}]
  %s2 = inlined_call_operand.vmem [shape: f32[1,32], index: 2, kind: input, shape index: {}]
  %s3 = inlined_call_operand.hbm [shape: f32[2,32], index: 3, kind: output, shape index: {}]
  %s4 = sld [smem:[#allocation0]]
  $region30: #{tpu_custom_call.1} parent=0
    _
  %s6 = ssub.s32 1, %s4
  %s7 = scalar_select 0, %s6, %s4
  $region1: #{tpu_custom_call.1} parent=0
    #allocation2 [shape = 'u8[8192]{0}', space=vmem, size = 0x2000, scoped, tag = 'input window, operand 0, single buffered']
    #allocation3 [shape = 's32[1]{0}', space=sflag, size = 0x4, scoped, tag = 'scoped memory for tpu_custom_call.1']
    #allocation4 [shape = 's32[1]{0}', space=sflag, size = 0x4, scoped, tag = 'scoped memory for tpu_custom_call.1']
    #allocation5 [shape = 'u8[16384]{0}', space=vmem, size = 0x4000, scoped, tag = 'input window, operand 1, single buffered']
    #allocation6 [shape = 's32[1]{0}', space=sflag, size = 0x4, scoped, tag = 'scoped memory for tpu_custom_call.1']
    #allocation7 [shape = 'u8[1024]{0}', space=vmem, size = 0x400, scoped, tag = 'output window, operand 0, single buffered']
    %8 = vsyncpa [#allocation3], 0
    %9 = vsyncpa [#allocation6], 0
    %10 = vsyncpa [#allocation4], 0
    // Predicated region
    $region2: #{tpu_custom_call.1} parent=1 // pred_check
      _
    $region3: #{tpu_custom_call.1} parent=1 // pred_check_branch
      %12 = sbr.rel (0) target = $region5
    $region4: #{tpu_custom_call.1} parent=1 // pred_region
      %s14 = ssub.s32 256, 256
      %15 = vsyncadd [#allocation3], %s14
      %s16 = sshll.u32 [#allocation2], 4
      %s17 = int_to_ptr.vmem [resolvable:$true] %s16
      %22 = dma.hbm_to_vmem [thread:$0]  %s0, 256, %s17, [#allocation3], 128, 128, 8
    $region5: #{tpu_custom_call.1} parent=1 // pred_fallthru
      _
    // Predicated region
    $region6: #{tpu_custom_call.1} parent=1 // pred_check
      _
    $region7: #{tpu_custom_call.1} parent=1 // pred_check_branch
      %24 = sbr.rel (0) target = $region9
    $region8: #{tpu_custom_call.1} parent=1 // pred_region
      %s26 = ssub.s32 512, 512
      %27 = vsyncadd [#allocation6], %s26
      %s28 = sshll.u32 [#allocation5], 4
      %s29 = int_to_ptr.vmem [resolvable:$true] %s28
      %34 = dma.hbm_to_vmem [thread:$0]  %s1, 512, %s29, [#allocation6], 128, 128, 8
    $region9: #{tpu_custom_call.1} parent=1 // pred_fallthru
      _
    // Predicated region
    $region10: #{tpu_custom_call.1} parent=1 // pred_check
      _
    $region11: #{tpu_custom_call.1} parent=1 // pred_check_branch
      %36 = sbr.rel (0) target = $region13
    $region12: #{tpu_custom_call.1} parent=1 // pred_region
      _
    $region13: #{tpu_custom_call.1} parent=1 // pred_fallthru
      _
    // Predicated region
    $region14: #{tpu_custom_call.1} parent=1 // pred_check
      _
    $region15: #{tpu_custom_call.1} parent=1 // pred_check_branch
      %38 = sbr.rel (0) target = $region17
    $region16: #{tpu_custom_call.1} parent=1 // pred_region
      %39 = dma.done [#allocation3], 256
    $region17: #{tpu_custom_call.1} parent=1 // pred_fallthru
      _
    // Predicated region
    $region18: #{tpu_custom_call.1} parent=1 // pred_check
      _
    $region19: #{tpu_custom_call.1} parent=1 // pred_check_branch
      %41 = sbr.rel (0) target = $region21
    $region20: #{tpu_custom_call.1} parent=1 // pred_region
      %42 = dma.done [#allocation6], 512
    $region21: #{tpu_custom_call.1} parent=1 // pred_fallthru
      _
    %v43 = vld [vmem:[#allocation2] sm:$0xff]
    %v44 = vld [vmem:[#allocation2 + $0x8] sm:$0xff]
    %v45 = vld [vmem:[#allocation5] sm:$0xff]
    %v46 = vld [vmem:[#allocation5 + $0x8] sm:$0xff]
    %v47 = vld [vmem:[#allocation5 + $0x10] sm:$0xff]
    %v48 = vld [vmem:[#allocation5 + $0x18] sm:$0xff]
    %v49 = vld [vmem:[%s2] sm:$0x1]
    %v51 = vlaneseq
    %v52 = vshrl.u32 %v51, 7
    %v53 = vsub.s32 0, %v52
    %v54 = vrot.slane %v49, %v53
    %vm56 = vcmask 261120
    %v58 = vsel %vm56, %v43, 0
    %v61 = vsel %vm56, %v44, 0
    %63 = vmatprep.subr.mxu0 0.0
    %64 = vmatpush1.msra.mxu0 %v45
    %65 = vmatprep.subr.mxu0 0.0
    %66 = vmatpush1.msra.mxu0 %v46
    %67 = vmatprep.subr.mxu0 0.0
    %68 = vmatpush1.msra.mxu0 %v47
    %69 = vmatprep.subr.mxu0 0.0
    %70 = vmatpush1.msra.mxu0 %v48
    %71 = vmatprep.subr.mxu0 0.0
    %72 = vmatpush1.msra.mxu0 0.0
    %73 = vmatprep.subr.mxu0 0.0
    %74 = vmatpush1.msra.mxu0 0.0
    %75 = vmatprep.subr.mxu0 0.0
    %76 = vmatpush1.msra.mxu0 0.0
    %77 = vmatprep.subr.mxu0 0.0
    %78 = vmatpush1.msra.mxu0 0.0
    %79 = vmatprep.subr.mxu0 0.0
    %80 = vmatpush1.msra.mxu0 0.0
    %81 = vmatprep.subr.mxu0 0.0
    %82 = vmatpush1.msra.mxu0 0.0
    %83 = vmatprep.subr.mxu0 0.0
    %84 = vmatpush1.msra.mxu0 0.0
    %85 = vmatprep.subr.mxu0 0.0
    %86 = vmatpush1.msra.mxu0 0.0
    %87 = vmatprep.subr.mxu0 0.0
    %88 = vmatpush1.msra.mxu0 0.0
    %89 = vmatprep.subr.mxu0 0.0
    %90 = vmatpush1.msra.mxu0 0.0
    %91 = vmatprep.subr.mxu0 0.0
    %92 = vmatpush1.msra.mxu0 0.0
    %93 = vmatprep.subr.mxu0 0.0
    %94 = vmatpush1.msra.mxu0 0.0
    %95 = vmatprep.subr.mxu0 0.0
    %96 = vmatpush1.msra.mxu0 0.0
    %97 = vmatprep.subr.mxu0 0.0
    %98 = vmatpush1.msra.mxu0 0.0
    %99 = vmatprep.subr.mxu0 0.0
    %100 = vmatpush1.msra.mxu0 0.0
    %101 = vmatprep.subr.mxu0 0.0
    %102 = vmatpush1.msra.mxu0 0.0
    %103 = vmatprep.subr.mxu0 0.0
    %104 = vmatpush1.msra.mxu0 0.0
    %105 = vmatprep.subr.mxu0 0.0
    %106 = vmatpush1.msra.mxu0 0.0
    %107 = vmatprep.subr.mxu0 0.0
    %108 = vmatpush1.msra.mxu0 0.0
    %109 = vmatprep.subr.mxu0 0.0
    %110 = vmatpush1.msra.mxu0 0.0
    %111 = vmatprep.subr.mxu0 0.0
    %112 = vmatpush1.msra.mxu0 0.0
    %113 = vmatprep.subr.mxu0 0.0
    %114 = vmatpush1.msra.mxu0 0.0
    %115 = vmatprep.subr.mxu0 0.0
    %116 = vmatpush1.msra.mxu0 0.0
    %117 = vmatprep.subr.mxu0 0.0
    %118 = vmatpush1.msra.mxu0 0.0
    %119 = vmatprep.subr.mxu0 0.0
    %120 = vmatpush1.msra.mxu0 0.0
    %121 = vmatprep.subr.mxu0 0.0
    %122 = vmatpush1.msra.mxu0 0.0
    %123 = vmatprep.subr.mxu0 0.0
    %124 = vmatpush1.msra.mxu0 0.0
    %125 = vmatprep.subr.mxu0 0.0
    %126 = vmatpush1.msra.mxu0 0.0
    %127 = vmatprep.mubr.f32.mxu0 0.0
    %128 = vmatmul.mubr.f32.gmra.mrb[0].mxu0 %v58
    %v129 = vpop.f32.mrb[0].mxu0
    %v130 = vadd.f32 %v54, %v129
    %v131 = vpop.f32.mrb[0].mxu0
    %132 = vmatprep.mubr.f32.mxu0 0.0
    %133 = vmatmul.mubr.f32.gmra.mrb[0].mxu0 %v61
    %v134 = vpop.f32.mrb[0].mxu0
    %v135 = vadd.f32 %v54, %v134
    %v136 = vpop.f32.mrb[0].mxu0
    %137 = vdwg.mxu0
    %v138 = vtanh.pop %v130
    %v139 = vtanh.pop %v135
    %v140 = vmul.f32 %v138, 1.442695
    %v141 = vpow.pop %v140
    %v142 = vmul.f32 %v139, 1.442695
    %v143 = vpow.pop %v142
    %v144 = vmul.f32 %v141, %v43
    %v145 = vmul.f32 %v143, %v44
    %v146 = vsel %vm56, %v144, 0.0
    %v147 = vrot.slane %v146, 4
    %v148 = vadd.f32 %v146, %v147
    %v149 = vrot.slane %v148, 2
    %v150 = vadd.f32 %v148, %v149
    %v151 = vrot.slane %v150, 1
    %v152 = vadd.f32 %v150, %v151
    %v153 = vsel %vm56, %v145, 0.0
    %v154 = vrot.slane %v153, 4
    %v155 = vadd.f32 %v153, %v154
    %v156 = vrot.slane %v155, 2
    %v157 = vadd.f32 %v155, %v156
    %v158 = vrot.slane %v157, 1
    %v159 = vadd.f32 %v157, %v158
    %v160 = vsel %vm56, %v141, 0.0
    %v161 = vrot.slane %v160, 4
    %v162 = vadd.f32 %v160, %v161
    %v163 = vrot.slane %v162, 2
    %v164 = vadd.f32 %v162, %v163
    %v165 = vrot.slane %v164, 1
    %v166 = vadd.f32 %v164, %v165
    %v167 = vsel %vm56, %v143, 0.0
    %v168 = vrot.slane %v167, 4
    %v169 = vadd.f32 %v167, %v168
    %v170 = vrot.slane %v169, 2
    %v171 = vadd.f32 %v169, %v170
    %v172 = vrot.slane %v171, 1
    %v173 = vadd.f32 %v171, %v172
    %v174 = vrcp.pop %v166
    %v175 = vrcp.pop %v173
    %v176 = vmul.f32 %v166, %v174
    %v177 = vmul.f32 %v173, %v175
    %v178 = vsub.f32 2.0, %v176
    %v179 = vsub.f32 2.0, %v177
    %v180 = vmul.f32 %v174, %v178
    %v181 = vmul.f32 %v175, %v179
    %v182 = vmul.f32 %v152, %v180
    %v183 = vmul.f32 %v159, %v181
    %vm186 = vcmask 1041409
    %v187 = vsel %vm186, %v183, %v182
    %vm189 = vcmask 254976
    %190 = vst.msk [vmem:[#allocation7] sm:$0x3] %vm189, %v187
    // Predicated region
    $region22: #{tpu_custom_call.1} parent=1 // pred_check
      _
    $region23: #{tpu_custom_call.1} parent=1 // pred_check_branch
      %192 = sbr.rel (0) target = $region25
    $region24: #{tpu_custom_call.1} parent=1 // pred_region
      %s194 = ssub.s32 32, 32
      %195 = vsyncadd [#allocation4], %s194
      %s197 = sshll.u32 [#allocation7], 4
      %s198 = int_to_ptr.vmem [resolvable:$true] %s197
      %200 = dma.vmem_to_hbm [thread:$0]  %s198, 32, %s3, [#allocation4]
    $region25: #{tpu_custom_call.1} parent=1 // pred_fallthru
      _
    // Predicated region
    $region26: #{tpu_custom_call.1} parent=1 // pred_check
      _
    $region27: #{tpu_custom_call.1} parent=1 // pred_check_branch
      %202 = sbr.rel (0) target = $region29
    $region28: #{tpu_custom_call.1} parent=1 // pred_region
      %203 = dma.done [#allocation4], 32
    $region29: #{tpu_custom_call.1} parent=1 // pred_fallthru
      _
    %204 = vsyncpa [#allocation3], 1
    %205 = vsyncpa [#allocation6], 1
    %206 = vsyncpa [#allocation4], 1

</llo_original>
